<compile_context>
chip_gen: v5e
topology: v5e:2x2
jax: 0.10.0
libtpu: 0.0.40
codegen_flags: <defaults>
</compile_context>

<pallas_src>
import functools
import math

import jax
import jax.numpy as jnp
from jax.experimental import pallas as pl
from jax.experimental.pallas import tpu as pltpu

_MAX_TILE_BYTES = 2 * 1024 * 1024   # per-buffer tile cap (safe on v5e/v6e/v7x)


def _round_up(x: int, m: int) -> int:
    return ((x + m - 1) // m) * m


def _pick_tile_h(h: int, w: int, itemsize: int) -> int:
    """Row-tile size: dtype-aware sublane multiple, <=2 MiB, >=2 grid steps."""
    sublane = max(8, 32 // itemsize)           # 8 f32, 16 bf16, 32 int8/fp8
    rows_by_vmem = (_MAX_TILE_BYTES // max(1, w * itemsize)) // sublane * sublane
    rows_by_vmem = max(sublane, rows_by_vmem)
    # Aim for at least 2 grid programs so v7x can use both TensorCores.
    target = _round_up(pl.cdiv(h, 2), sublane)
    tile = min(rows_by_vmem, target)
    if tile >= h:
        return h                                # full extent is always legal
    return max(sublane, tile)


def _depth_norm_kernel(img_ref, out_ref, *, inv_max_depth, max_depth,
                       min_depth, clamp_max_before_scale):
    # img_ref/out_ref: (tile_h, W) view of the depth channel only.
    d = img_ref[...]
    d = jnp.maximum(d, jnp.asarray(min_depth, d.dtype))
    if clamp_max_before_scale:
        d = jnp.minimum(d, jnp.asarray(max_depth, d.dtype))
    out_ref[...] = d * jnp.asarray(inv_max_depth, d.dtype)


def depth_norm(image: jax.Array,
               max_depth: float,
               clamp_max_before_scale: bool = False,
               min_depth: float = 0.01) -> jax.Array:
    """Pallas implementation of DepthNorm.forward for a (4, H, W) image."""
    if max_depth < 0.0:
        raise ValueError("max_depth must be > 0; got %.2f" % max_depth)
    c, h, w = image.shape
    if c != 4:
        raise ValueError(
            f"This transform is for 4 channel RGBD input only; got {image.shape}")

    inv_max_depth = (1.0 / max_depth) if max_depth > 0.0 else math.inf

    itemsize = jnp.dtype(image.dtype).itemsize
    tile_h = _pick_tile_h(h, w, itemsize)
    grid = (pl.cdiv(h, tile_h),)

    kernel = functools.partial(
        _depth_norm_kernel,
        inv_max_depth=inv_max_depth,
        max_depth=max_depth,
        min_depth=min_depth,
        clamp_max_before_scale=clamp_max_before_scale,
    )

    # Channel dim is squeezed (block size 1) and pinned to 3 by the index_map;
    # RGB planes are never read or written -- they survive via aliasing.
    depth_spec = pl.BlockSpec((None, tile_h, w), lambda i: (3, i, 0))

    return pl.pallas_call(
        kernel,
        out_shape=jax.ShapeDtypeStruct((c, h, w), image.dtype),
        grid=grid,
        in_specs=[depth_spec],
        out_specs=depth_spec,
        input_output_aliases={0: 0},
        compiler_params=pltpu.CompilerParams(
            dimension_semantics=("parallel",)),
    )(image)


def _reference(image, max_depth, clamp_max_before_scale, min_depth):
    color = image[:3]
    depth = jnp.maximum(image[3:4], jnp.asarray(min_depth, image.dtype))
    if clamp_max_before_scale:
        depth = jnp.minimum(depth, jnp.asarray(max_depth, image.dtype))
    depth = depth / jnp.asarray(max_depth, image.dtype)
    return jnp.concatenate([color, depth], axis=0)


if __name__ == "__main__":
    key = jax.random.PRNGKey(0)
    H, W = 16, 16
    # RGBD image; depth channel includes negative values (Midas-style inverse
    # depth) so the min-clamp path is exercised.
    image = jax.random.normal(key, (4, H, W), dtype=jnp.float32) * 5.0

    max_depth = 10.0
    min_depth = 0.01

    ok = True
    for clamp_max_before_scale in (True, False):
        out = depth_norm(image, max_depth, clamp_max_before_scale, min_depth)
        out = jax.block_until_ready(out)
        ref = _reference(image, max_depth, clamp_max_before_scale, min_depth)
        ok &= out.shape == (4, H, W)
        ok &= out.dtype == image.dtype
        # RGB channels must be bit-identical (pure pass-through via aliasing).
        ok &= bool(jnp.array_equal(out[:3], image[:3]))
        ok &= bool(jnp.allclose(out, ref, atol=1e-6, rtol=1e-6))

    assert ok
    print("KERNEL_OK")
</pallas_src>

<mosaic_0001>
module attributes {stable_mosaic.version = 11 : i64} {
  func.func @_depth_norm_kernel(%arg0: i32, %arg1: memref<1x8x16xf32, #tpu.memory_space<vmem>>, %arg2: memref<1x8x16xf32, #tpu.memory_space<vmem>>) attributes {dimension_semantics = [#tpu.dimension_semantics<parallel>], iteration_bounds = array<i64: 2>, scalar_prefetch = 0 : i64, scratch_operands = 0 : i64, tpu.core_type = #tpu.core_type<tc>, window_params = [{transform_indices = @transform_0, window_bounds = array<i64: 1, 8, 16>}, {transform_indices = @transform_1, window_bounds = array<i64: 1, 8, 16>}]} {
    %c0 = arith.constant 0 : index
    %c0_0 = arith.constant 0 : index
    %c0_1 = arith.constant 0 : index
    %0 = vector.load %arg1[%c0, %c0_0, %c0_1] : memref<1x8x16xf32, #tpu.memory_space<vmem>>, vector<1x8x16xf32>
    %1 = vector.shape_cast %0 : vector<1x8x16xf32> to vector<8x16xf32>
    %cst = arith.constant 0.00999999977 : f32
    %2 = vector.broadcast %cst : f32 to vector<8x16xf32>
    %3 = arith.maximumf %1, %2 : vector<8x16xf32>
    %cst_2 = arith.constant 1.000000e+01 : f32
    %4 = vector.broadcast %cst_2 : f32 to vector<8x16xf32>
    %5 = arith.minimumf %3, %4 : vector<8x16xf32>
    %cst_3 = arith.constant 1.000000e-01 : f32
    %6 = vector.broadcast %cst_3 : f32 to vector<8x16xf32>
    %7 = arith.mulf %5, %6 : vector<8x16xf32>
    %c0_4 = arith.constant 0 : index
    %c0_5 = arith.constant 0 : index
    %c0_6 = arith.constant 0 : index
    %8 = vector.load %arg2[%c0_4, %c0_5, %c0_6] : memref<1x8x16xf32, #tpu.memory_space<vmem>>, vector<1x8x16xf32>
    %9 = vector.shape_cast %8 : vector<1x8x16xf32> to vector<8x16xf32>
    %10 = vector.shape_cast %7 : vector<8x16xf32> to vector<1x8x16xf32>
    tpu.vector_store %arg2[%c0_4, %c0_5, %c0_6], %10 {strides = array<i32>} : memref<1x8x16xf32, #tpu.memory_space<vmem>>, vector<1x8x16xf32>,
    return
  }
  func.func @transform_0(%arg0: i32) -> (i32, i32, i32) {
    %c3_i32 = arith.constant 3 : i32
    %c0_i32 = arith.constant 0 : i32
    %c0_i32_0 = arith.constant 0 : i32
    return %c3_i32, %arg0, %c0_i32 : i32, i32, i32
  }
  func.func @transform_1(%arg0: i32) -> (i32, i32, i32) {
    %c3_i32 = arith.constant 3 : i32
    %c0_i32 = arith.constant 0 : i32
    %c0_i32_0 = arith.constant 0 : i32
    return %c3_i32, %arg0, %c0_i32 : i32, i32, i32
  }
}

</mosaic_0001>

<llo_original>
// kernel: tpu_custom_call.1
$region0: #{tpu_custom_call.1}
  #allocation0 [shape = 'u32[]', space=smem, size = 0x4, offset = 0x4, fixed_abs, tag = 'smem constant byte address 0x4 - core index']
  #allocation1 [shape = 'u32[72,128]{1,0:T(1,128)}', space=vmem, size = 0x9000, scoped, tag = 'internal scratch']
  %s0 = inlined_call_operand.hbm [shape: f32[4,16,16], index: 0, kind: input, shape index: {}, may-alias: {0,1}]
  %s1 = inlined_call_operand.hbm [shape: f32[4,16,16], index: 1, kind: output, shape index: {}, may-alias: {0,1}]
  %s2 = sld [smem:[#allocation0]]
  $region41: #{tpu_custom_call.1} parent=0
    _
  %s4 = ssub.s32 1, %s2
  %s5 = scalar_select 0, %s4, %s2
  $region1: #{tpu_custom_call.1} parent=0
    #allocation2 [shape = 'u8[8192]{0}', space=vmem, size = 0x2000, scoped, tag = 'input window, operand 0']
    #allocation3 [shape = 's32[2]{0}', space=sflag, size = 0x8, scoped, tag = 'scoped memory for tpu_custom_call.1']
    #allocation4 [shape = 's32[2]{0}', space=sflag, size = 0x8, scoped, tag = 'scoped memory for tpu_custom_call.1']
    #allocation5 [shape = 'u8[8192]{0}', space=vmem, size = 0x2000, scoped, tag = 'output window, operand 0']
    %6 = vsyncpa [#allocation3], 0
    %s7 = scalar_lea.sflag [#allocation3], 1
    %8 = vsyncpa %s7, 0
    %9 = vsyncpa [#allocation4], 0
    %s10 = scalar_lea.sflag [#allocation4], 1
    %11 = vsyncpa %s10, 0
    loop: start=0, step=1, limit=4
    $region2: #{tpu_custom_call.1} parent=1 // loop_pre_header
      _
    $region3: #{tpu_custom_call.1} parent=1 // loop_header
      %s13 = sphi 0, %s17
      %p14 = scmp.ge.s32.totalorder %s13, 4
      %s23 = sphi 0, %s25
      %s26 = sphi 0, %s23
      %s27 = sphi 0, %s26
      %s43 = sphi 0, %s27
      %s49 = sphi 0, %s51
      %s52 = sphi 0, %s49
      %s53 = sphi 0, %s52
      %s69 = sphi 0, %s53
    $region4: #{tpu_custom_call.1} parent=1 // loop_header_branch
      %16 = sbr.rel (%p14) target = $region8
    $region5: #{tpu_custom_call.1} parent=1 // loop_body
      %s18 = ssub.s32 %s13, 1
      %s19 = ssub.s32 %s13, 2
      %s20 = sadd.s32 %s13, 1
      %s21 = ssub.s32 %s13, %s20
      %p22 = scmp.eq.s32.totalorder %s21, 0
      %s24 = sadd.s32 %s23, 1
      %s25 = scalar_select %p22, %s23, %s24
      %p28 = pneg %p22
      %p29 = scmp.eq.s32.totalorder %s13, 1
      %p30 = por %p28, %p29
      %p31 = scmp.ne.s32.totalorder %s23, %s26
      %p32 = scmp.eq.s32.totalorder %s13, 0
      %p33 = por %p31, %p32
      %p34 = scmp.ne.s32.totalorder %s23, %s26
      %p35 = scmp.eq.s32.totalorder %s18, 1
      %p36 = por %p34, %p35
      %p37 = scmp.ne.s32.totalorder %s26, %s27
      %p38 = scmp.eq.s32.totalorder %s18, 0
      %p39 = por %p37, %p38
      %p40 = scmp.ne.s32.totalorder %s26, %s27
      %p41 = scmp.eq.s32.totalorder %s19, 1
      %p42 = por %p40, %p41
      %p44 = scmp.ne.s32.totalorder %s27, %s43
      %p45 = scmp.eq.s32.totalorder %s19, 0
      %p46 = por %p44, %p45
      %s47 = ssub.s32 %s13, %s20
      %p48 = scmp.eq.s32.totalorder %s47, 0
      %s50 = sadd.s32 %s49, 1
      %s51 = scalar_select %p48, %s49, %s50
      %p54 = pneg %p48
      %p55 = scmp.eq.s32.totalorder %s13, 1
      %p56 = por %p54, %p55
      %p57 = scmp.ne.s32.totalorder %s49, %s52
      %p58 = scmp.eq.s32.totalorder %s13, 0
      %p59 = por %p57, %p58
      %p60 = scmp.ne.s32.totalorder %s49, %s52
      %p61 = scmp.eq.s32.totalorder %s18, 1
      %p62 = por %p60, %p61
      %p63 = scmp.ne.s32.totalorder %s52, %s53
      %p64 = scmp.eq.s32.totalorder %s18, 0
      %p65 = por %p63, %p64
      %p66 = scmp.ne.s32.totalorder %s52, %s53
      %p67 = scmp.eq.s32.totalorder %s19, 1
      %p68 = por %p66, %p67
      %p70 = scmp.ne.s32.totalorder %s53, %s69
      %p71 = scmp.eq.s32.totalorder %s19, 0
      %p72 = por %p70, %p71
      %p73 = scmp.le.s32.totalorder 1, %s13
      %p74 = scmp.lt.s32.totalorder %s13, 3
      %p75 = pnand %p73, %p74
      %p76 = pneg %p75
      // Predicated region
      $region9: #{tpu_custom_call.1} parent=5 // pred_check
        _
      $region10: #{tpu_custom_call.1} parent=5 // pred_check_branch
        %78 = sbr.rel (%p75) target = $region12
      $region11: #{tpu_custom_call.1} parent=5 // pred_region
        %s79 = ssub.s32 %s13, 1
      $region12: #{tpu_custom_call.1} parent=5 // pred_fallthru
        _
      %p80 = scmp.lt.s32.totalorder %s13, 2
      // Predicated region
      $region13: #{tpu_custom_call.1} parent=5 // pred_check
        %p81 = pneg %p80
      $region14: #{tpu_custom_call.1} parent=5 // pred_check_branch
        %83 = sbr.rel (%p81) target = $region16
      $region15: #{tpu_custom_call.1} parent=5 // pred_region
        // Predicated region
        $region17: #{tpu_custom_call.1} parent=15 // pred_check
          %p84 = pneg %p33
        $region18: #{tpu_custom_call.1} parent=15 // pred_check_branch
          %86 = sbr.rel (%p84) target = $region20
        $region19: #{tpu_custom_call.1} parent=15 // pred_region
          %s87 = sand.u32 %s23, 1
          %s88 = scalar_lea.sflag [#allocation3], %s87
          %s89 = sand.u32 %s23, 1
          %s90 = smul.addr %s89, 8
          %s91 = scalar_lea.vmem [#allocation2], %s90
          %93 = vsyncadd %s88, 0
          %s94 = sadd.s32 %s13, 6
          %s95 = smul.addr %s94, 8
          %s96 = scalar_lea.hbm %s0, %s95
          %s98 = sshll.u32 %s96, 4
          %s99 = int_to_ptr.hbm [resolvable:$true] %s98
          %s100 = sshll.u32 %s91, 4
          %s101 = int_to_ptr.vmem [resolvable:$true] %s100
          %103 = dma.hbm_to_vmem [thread:$0]  %s99, 128, %s101, %s88
        $region20: #{tpu_custom_call.1} parent=15 // pred_fallthru
          _
      $region16: #{tpu_custom_call.1} parent=5 // pred_fallthru
        _
      %p104 = scmp.le.s32.totalorder 1, %s13
      %p105 = scmp.lt.s32.totalorder %s13, 3
      %p106 = pnand %p104, %p105
      %p107 = pneg %p106
      // Predicated region
      $region21: #{tpu_custom_call.1} parent=5 // pred_check
        _
      $region22: #{tpu_custom_call.1} parent=5 // pred_check_branch
        %109 = sbr.rel (%p106) target = $region24
      $region23: #{tpu_custom_call.1} parent=5 // pred_region
        %s110 = ssub.s32 %s13, 1
        %s111 = sand.u32 %s26, 1
        %s112 = scalar_lea.sflag [#allocation3], %s111
        %s113 = sand.u32 %s26, 1
        %s114 = smul.addr %s113, 8
        %s115 = scalar_lea.vmem [#allocation2], %s114
        // Predicated region
        $region25: #{tpu_custom_call.1} parent=23 // pred_check
          %p116 = pneg %p39
        $region26: #{tpu_custom_call.1} parent=23 // pred_check_branch
          %118 = sbr.rel (%p116) target = $region28
        $region27: #{tpu_custom_call.1} parent=23 // pred_region
          %120 = dma.done %s112, 128
        $region28: #{tpu_custom_call.1} parent=23 // pred_fallthru
          _
        %s121 = sand.u32 %s26, 1
        %s122 = scalar_lea.sflag [#allocation3], %s121
        %s123 = sand.u32 %s26, 1
        %s124 = smul.addr %s123, 8
        %s125 = scalar_lea.vmem [#allocation2], %s124
        %p126 = pneg %p39
        %p127 = pneg %p36
        %p128 = pneg %p65
        %p129 = pneg %p62
        %s130 = sand.u32 %s52, 1
        %s131 = scalar_lea.sflag [#allocation4], %s130
        %s132 = sand.u32 %s52, 1
        %s133 = smul.addr %s132, 8
        %s134 = scalar_lea.vmem [#allocation5], %s133
        %v135 = vld [vmem:[%s115] sm:$0xff]
        %v136 = vmax.f32 %v135, 0.01
        %v137 = vmin.f32 %v136, 10.0
        %v138 = vmul.f32 %v137, 0.1
        %vm139 = vcmask 130048
        %140 = vst.msk [vmem:[%s134] sm:$0xff] %vm139, %v138
        %s141 = sand.u32 %s52, 1
        %s142 = scalar_lea.sflag [#allocation4], %s141
        %s143 = sand.u32 %s52, 1
        %s144 = smul.addr %s143, 8
        %s145 = scalar_lea.vmem [#allocation5], %s144
        // Predicated region
        $region29: #{tpu_custom_call.1} parent=23 // pred_check
          %p146 = pneg %p62
        $region30: #{tpu_custom_call.1} parent=23 // pred_check_branch
          %148 = sbr.rel (%p146) target = $region32
        $region31: #{tpu_custom_call.1} parent=23 // pred_region
          %150 = vsyncadd %s142, 0
          %s151 = sadd.s32 %s18, 6
          %s152 = smul.addr %s151, 8
          %s153 = scalar_lea.hbm %s1, %s152
          %s155 = sshll.u32 %s145, 4
          %s156 = int_to_ptr.vmem [resolvable:$true] %s155
          %s157 = sshll.u32 %s153, 4
          %s158 = int_to_ptr.hbm [resolvable:$true] %s157
          %160 = dma.vmem_to_hbm [thread:$0]  %s156, 128, %s158, %s142
        $region32: #{tpu_custom_call.1} parent=23 // pred_fallthru
          _
      $region24: #{tpu_custom_call.1} parent=5 // pred_fallthru
        _
      %p161 = scmp.le.s32.totalorder 2, %s13
      // Predicated region
      $region33: #{tpu_custom_call.1} parent=5 // pred_check
        %p162 = pneg %p161
      $region34: #{tpu_custom_call.1} parent=5 // pred_check_branch
        %164 = sbr.rel (%p162) target = $region36
      $region35: #{tpu_custom_call.1} parent=5 // pred_region
        %s165 = ssub.s32 %s13, 2
        // Predicated region
        $region37: #{tpu_custom_call.1} parent=35 // pred_check
          %p166 = pneg %p68
        $region38: #{tpu_custom_call.1} parent=35 // pred_check_branch
          %168 = sbr.rel (%p166) target = $region40
        $region39: #{tpu_custom_call.1} parent=35 // pred_region
          %s169 = sand.u32 %s53, 1
          %s170 = scalar_lea.sflag [#allocation4], %s169
          %s171 = sand.u32 %s53, 1
          %s172 = smul.addr %s171, 8
          %s173 = scalar_lea.vmem [#allocation5], %s172
          %175 = dma.done %s170, 128
        $region40: #{tpu_custom_call.1} parent=35 // pred_fallthru
          _
      $region36: #{tpu_custom_call.1} parent=5 // pred_fallthru
        _
    $region6: #{tpu_custom_call.1} parent=1 // loop_footer
      %s17 = sadd.s32 1, %s13
    $region7: #{tpu_custom_call.1} parent=1 // loop_footer_branch
      %12 = sbr.rel target = $region3
    $region8: #{tpu_custom_call.1} parent=1 // loop_exit
      _
    %176 = vsyncpa [#allocation3], 1
    %s177 = scalar_lea.sflag [#allocation3], 1
    %178 = vsyncpa %s177, 1
    %179 = vsyncpa [#allocation4], 1
    %s180 = scalar_lea.sflag [#allocation4], 1
    %181 = vsyncpa %s180, 1

</llo_original>
